<compile_context>
chip_gen: v6e
topology: v6e:2x2x1
jax: 0.10.0
libtpu: 0.0.40
codegen_flags: <defaults>
</compile_context>

<pallas_src>
import functools

import jax
import jax.numpy as jnp
from jax.experimental import pallas as pl
from jax.experimental.pallas import tpu as pltpu

DEFAULT_EPS = 8.0 / 255.0   # l-inf threat-model bound (perturbation_params.epsilon)
LANE = 128
SUBLANE = 8
TARGET_TILE_ROWS = 2048     # 2048 x 128 f32 = 1 MiB per input tile


def _perturb_kernel(x_ref, delta_ref, o_ref, *, eps):
    """Elementwise: clamp(x + clamp(delta, -eps, eps), 0, 1)."""
    x = x_ref[...].astype(jnp.float32)
    d = delta_ref[...].astype(jnp.float32)
    d = jnp.clip(d, -eps, eps)           # constrain_params(): project onto l-inf ball
    adv = jnp.clip(x + d, 0.0, 1.0)      # make_valid_image(): stay a valid image
    o_ref[...] = adv.astype(o_ref.dtype)


def adversarial_forward(x, delta, epsilon=DEFAULT_EPS):
    """Apply the adversarial perturbation `delta` to images `x` (NCHW)."""
    assert x.shape == delta.shape, "delta must match the minibatch it was set up for"
    orig_shape = x.shape
    orig_dtype = x.dtype
    n_elems = x.size

    x_flat = x.reshape(-1)
    d_flat = delta.reshape(-1)

    # Lane padding only when the flat size is not a multiple of 128 (tiny pad).
    lane_pad = (-n_elems) % LANE
    if lane_pad:
        x_flat = jnp.pad(x_flat, (0, lane_pad))
        d_flat = jnp.pad(d_flat, (0, lane_pad))

    rows = x_flat.size // LANE
    x2 = x_flat.reshape(rows, LANE)      # bitcast-compatible reshape: no HBM copy
    d2 = d_flat.reshape(rows, LANE)

    # Big lane-dense tiles: either the whole array (always a legal block shape)
    # or 2048-row (1 MiB f32) blocks with a Pallas-masked partial last block.
    if rows <= TARGET_TILE_ROWS:
        tr = rows
    else:
        tr = TARGET_TILE_ROWS            # multiple of 8 -> legal (8,128) tiling
    grid = (pl.cdiv(rows, tr),)

    kernel = functools.partial(_perturb_kernel, eps=float(epsilon))

    out2 = pl.pallas_call(
        kernel,
        out_shape=jax.ShapeDtypeStruct((rows, LANE), orig_dtype),
        grid_spec=pltpu.PrefetchScalarGridSpec(
            num_scalar_prefetch=0,
            grid=grid,
            in_specs=[
                pl.BlockSpec((tr, LANE), lambda i: (i, 0)),
                pl.BlockSpec((tr, LANE), lambda i: (i, 0)),
            ],
            out_specs=pl.BlockSpec((tr, LANE), lambda i: (i, 0)),
        ),
        compiler_params=pltpu.CompilerParams(
            dimension_semantics=("parallel",)),   # shards across TCs on v7x
    )(x2, d2)

    out_flat = out2.reshape(-1)
    if lane_pad:
        out_flat = out_flat[:n_elems]
    return out_flat.reshape(orig_shape)


class AdversarialPerturbationPallas:
    """JAX/Pallas analogue of mister_ed's AdversarialPerturbation skeleton
    (concrete additive l-inf forward)."""

    def __init__(self, epsilon=DEFAULT_EPS):
        self.epsilon = float(epsilon)
        self.initialized = False
        self.delta = None
        self.num_examples = None
        self.originals = None

    def setup(self, x):
        self.num_examples = x.shape[0]
        # deterministic parameter init (would be zeros / random_init in torch);
        # kept in the compute dtype so no per-call cast pass is needed.
        key = jax.random.PRNGKey(42)
        self.delta = jax.random.uniform(
            key, x.shape, dtype=jnp.float32,
            minval=-2.0 * self.epsilon, maxval=2.0 * self.epsilon)
        self.initialized = True

    def forward(self, x):
        if not self.initialized:
            self.setup(x)
        return adversarial_forward(x, self.delta, self.epsilon)

    __call__ = forward

    def adversarial_tensors(self, x=None):
        assert x is not None or self.originals is not None
        if x is None:
            x = self.originals
        return self.forward(x)

    def attach_originals(self, originals):
        assert self.originals is None
        self.originals = originals

    # TODO(synk): perturbation_norm / update_params / merge_perturbation are
    # optimizer-loop utilities with no forward-pass compute; not kernelized.


def _reference(x, delta, eps):
    d = jnp.clip(delta, -eps, eps)
    return jnp.clip(x + d, 0.0, 1.0)


if __name__ == "__main__":
    key = jax.random.PRNGKey(0)
    kx, _ = jax.random.split(key)
    # NCHW minibatch, values in [0, 1] like images
    x = jax.random.uniform(kx, (2, 4, 16, 16), dtype=jnp.float32)

    pert = AdversarialPerturbationPallas()
    adv = pert(x)                      # forward: apply perturbation
    adv = jax.block_until_ready(adv)

    ref = _reference(x, pert.delta, pert.epsilon)
    assert adv.shape == x.shape and adv.dtype == x.dtype
    assert jnp.allclose(adv, ref, atol=1e-6), "mismatch vs reference"

    # Exercise a non-default epsilon and a ragged (non-128-multiple) size too.
    pert2 = AdversarialPerturbationPallas(epsilon=4.0 / 255.0)
    x2 = jax.random.uniform(jax.random.PRNGKey(3), (2, 3, 15, 15), dtype=jnp.float32)
    adv2 = jax.block_until_ready(pert2(x2))
    ref2 = _reference(x2, pert2.delta, pert2.epsilon)
    assert jnp.allclose(adv2, ref2, atol=1e-6), "mismatch vs reference (eps/ragged)"

    print("KERNEL_OK")
</pallas_src>

<mosaic_0001>
module attributes {stable_mosaic.version = 11 : i64} {
  func.func @_perturb_kernel(%arg0: i32, %arg1: memref<16x128xf32, #tpu.memory_space<vmem>>, %arg2: memref<16x128xf32, #tpu.memory_space<vmem>>, %arg3: memref<16x128xf32, #tpu.memory_space<vmem>>) attributes {dimension_semantics = [#tpu.dimension_semantics<parallel>], iteration_bounds = array<i64: 1>, scalar_prefetch = 0 : i64, scratch_operands = 0 : i64, tpu.core_type = #tpu.core_type<tc>, window_params = [{transform_indices = @transform_0, window_bounds = array<i64: 16, 128>}, {transform_indices = @transform_1, window_bounds = array<i64: 16, 128>}, {transform_indices = @transform_2, window_bounds = array<i64: 16, 128>}]} {
    %c0 = arith.constant 0 : index
    %c0_0 = arith.constant 0 : index
    %0 = vector.load %arg1[%c0, %c0_0] : memref<16x128xf32, #tpu.memory_space<vmem>>, vector<16x128xf32>
    %c0_1 = arith.constant 0 : index
    %c0_2 = arith.constant 0 : index
    %1 = vector.load %arg2[%c0_1, %c0_2] : memref<16x128xf32, #tpu.memory_space<vmem>>, vector<16x128xf32>
    %cst = arith.constant -0.0313725509 : f32
    %cst_3 = arith.constant 0.0313725509 : f32
    %2 = vector.broadcast %cst : f32 to vector<16x128xf32>
    %3 = arith.maximumf %2, %1 : vector<16x128xf32>
    %4 = vector.broadcast %cst_3 : f32 to vector<16x128xf32>
    %5 = arith.minimumf %4, %3 : vector<16x128xf32>
    %6 = arith.addf %0, %5 : vector<16x128xf32>
    %cst_4 = arith.constant 0.000000e+00 : f32
    %cst_5 = arith.constant 1.000000e+00 : f32
    %7 = vector.broadcast %cst_4 : f32 to vector<16x128xf32>
    %8 = arith.maximumf %7, %6 : vector<16x128xf32>
    %9 = vector.broadcast %cst_5 : f32 to vector<16x128xf32>
    %10 = arith.minimumf %9, %8 : vector<16x128xf32>
    %c0_6 = arith.constant 0 : index
    %c0_7 = arith.constant 0 : index
    %11 = vector.load %arg3[%c0_6, %c0_7] : memref<16x128xf32, #tpu.memory_space<vmem>>, vector<16x128xf32>
    tpu.vector_store %arg3[%c0_6, %c0_7], %10 {strides = array<i32>} : memref<16x128xf32, #tpu.memory_space<vmem>>, vector<16x128xf32>,
    return
  }
  func.func @transform_0(%arg0: i32) -> (i32, i32) {
    %c0_i32 = arith.constant 0 : i32
    %c0_i32_0 = arith.constant 0 : i32
    return %arg0, %c0_i32 : i32, i32
  }
  func.func @transform_1(%arg0: i32) -> (i32, i32) {
    %c0_i32 = arith.constant 0 : i32
    %c0_i32_0 = arith.constant 0 : i32
    return %arg0, %c0_i32 : i32, i32
  }
  func.func @transform_2(%arg0: i32) -> (i32, i32) {
    %c0_i32 = arith.constant 0 : i32
    %c0_i32_0 = arith.constant 0 : i32
    return %arg0, %c0_i32 : i32, i32
  }
}

</mosaic_0001>

<llo_original>
// kernel: tpu_custom_call.1
$region0: #{tpu_custom_call.1}
  #allocation0 [shape = 'u32[]', space=smem, size = 0x4, offset = 0x4, fixed_abs, tag = 'smem constant byte address 0x4 - core index']
  #allocation1 [shape = 'u32[144,128]{1,0:T(1,128)}', space=vmem, size = 0x12000, scoped, tag = 'internal scratch']
  %s0 = inlined_call_operand.hbm [shape: f32[16,128], index: 0, kind: input, shape index: {}]
  %s1 = inlined_call_operand.hbm [shape: f32[16,128], index: 1, kind: input, shape index: {}]
  %s2 = inlined_call_operand.hbm [shape: f32[16,128], index: 2, kind: output, shape index: {}]
  %s3 = sld [smem:[#allocation0]]
  $region26: #{tpu_custom_call.1} parent=0
    _
  %s5 = ssub.s32 1, %s3
  %s6 = scalar_select 0, %s5, %s3
  $region1: #{tpu_custom_call.1} parent=0
    #allocation2 [shape = 'u8[8192]{0}', space=vmem, size = 0x2000, scoped, tag = 'input window, operand 0, single buffered']
    #allocation3 [shape = 's32[1]{0}', space=sflag, size = 0x4, scoped, tag = 'scoped memory for tpu_custom_call.1']
    #allocation4 [shape = 's32[1]{0}', space=sflag, size = 0x4, scoped, tag = 'scoped memory for tpu_custom_call.1']
    #allocation5 [shape = 'u8[8192]{0}', space=vmem, size = 0x2000, scoped, tag = 'input window, operand 1, single buffered']
    #allocation6 [shape = 's32[1]{0}', space=sflag, size = 0x4, scoped, tag = 'scoped memory for tpu_custom_call.1']
    #allocation7 [shape = 'u8[8192]{0}', space=vmem, size = 0x2000, scoped, tag = 'output window, operand 0, single buffered']
    %7 = vsyncpa [#allocation3], 0
    %8 = vsyncpa [#allocation6], 0
    %9 = vsyncpa [#allocation4], 0
    // Predicated region
    $region2: #{tpu_custom_call.1} parent=1 // pred_check
      _
    $region3: #{tpu_custom_call.1} parent=1 // pred_check_branch
      %11 = sbr.rel (0) target = $region5
    $region4: #{tpu_custom_call.1} parent=1 // pred_region
      %s13 = ssub.s32 256, 256
      %14 = vsyncadd [#allocation3], %s13
      %s15 = sshll.u32 [#allocation2], 4
      %s16 = int_to_ptr.vmem [resolvable:$true] %s15
      %21 = dma.hbm_to_vmem [thread:$0]  %s0, 256, %s16, [#allocation3], 128, 128, 8
    $region5: #{tpu_custom_call.1} parent=1 // pred_fallthru
      _
    // Predicated region
    $region6: #{tpu_custom_call.1} parent=1 // pred_check
      _
    $region7: #{tpu_custom_call.1} parent=1 // pred_check_branch
      %23 = sbr.rel (0) target = $region9
    $region8: #{tpu_custom_call.1} parent=1 // pred_region
      %s25 = ssub.s32 256, 256
      %26 = vsyncadd [#allocation6], %s25
      %s27 = sshll.u32 [#allocation5], 4
      %s28 = int_to_ptr.vmem [resolvable:$true] %s27
      %33 = dma.hbm_to_vmem [thread:$0]  %s1, 256, %s28, [#allocation6], 128, 128, 8
    $region9: #{tpu_custom_call.1} parent=1 // pred_fallthru
      _
    // Predicated region
    $region10: #{tpu_custom_call.1} parent=1 // pred_check
      _
    $region11: #{tpu_custom_call.1} parent=1 // pred_check_branch
      %35 = sbr.rel (0) target = $region13
    $region12: #{tpu_custom_call.1} parent=1 // pred_region
      %36 = dma.done [#allocation3], 256
    $region13: #{tpu_custom_call.1} parent=1 // pred_fallthru
      _
    // Predicated region
    $region14: #{tpu_custom_call.1} parent=1 // pred_check
      _
    $region15: #{tpu_custom_call.1} parent=1 // pred_check_branch
      %38 = sbr.rel (0) target = $region17
    $region16: #{tpu_custom_call.1} parent=1 // pred_region
      %39 = dma.done [#allocation6], 256
    $region17: #{tpu_custom_call.1} parent=1 // pred_fallthru
      _
    %v40 = vld [vmem:[#allocation2] sm:$0xff]
    %v41 = vld [vmem:[#allocation2 + $0x8] sm:$0xff]
    %v42 = vld [vmem:[#allocation5] sm:$0xff]
    %v43 = vld [vmem:[#allocation5 + $0x8] sm:$0xff]
    %v44 = vmax.f32 %v42, -0.03137255
    %v45 = vmax.f32 %v43, -0.03137255
    %v46 = vmin.f32 %v44, 0.03137255
    %v47 = vmin.f32 %v45, 0.03137255
    %v48 = vadd.f32 %v40, %v46
    %v49 = vadd.f32 %v41, %v47
    %v50 = vmax.f32 %v48, 0.0
    %v51 = vmax.f32 %v49, 0.0
    %v52 = vmin.f32 %v50, 1.0
    %v53 = vmin.f32 %v51, 1.0
    %54 = vst [vmem:[#allocation7] sm:$0xff] %v52
    %55 = vst [vmem:[#allocation7 + $0x8] sm:$0xff] %v53
    // Predicated region
    $region18: #{tpu_custom_call.1} parent=1 // pred_check
      _
    $region19: #{tpu_custom_call.1} parent=1 // pred_check_branch
      %57 = sbr.rel (0) target = $region21
    $region20: #{tpu_custom_call.1} parent=1 // pred_region
      %s59 = ssub.s32 256, 256
      %60 = vsyncadd [#allocation4], %s59
      %s61 = sshll.u32 [#allocation7], 4
      %s62 = int_to_ptr.vmem [resolvable:$true] %s61
      %67 = dma.vmem_to_hbm [thread:$0]  %s62, 256, %s2, [#allocation4], 128, 128, 8
    $region21: #{tpu_custom_call.1} parent=1 // pred_fallthru
      _
    // Predicated region
    $region22: #{tpu_custom_call.1} parent=1 // pred_check
      _
    $region23: #{tpu_custom_call.1} parent=1 // pred_check_branch
      %69 = sbr.rel (0) target = $region25
    $region24: #{tpu_custom_call.1} parent=1 // pred_region
      %70 = dma.done [#allocation4], 256
    $region25: #{tpu_custom_call.1} parent=1 // pred_fallthru
      _
    %71 = vsyncpa [#allocation3], 1
    %72 = vsyncpa [#allocation6], 1
    %73 = vsyncpa [#allocation4], 1

</llo_original>
